<compile_context>
chip_gen: v7x
topology: tpu7x:2x2x1
jax: 0.10.0
libtpu: 0.0.40
codegen_flags: <defaults>
</compile_context>

<pallas_src>
import jax
import jax.numpy as jnp
from jax.experimental import pallas as pl
from jax.experimental.pallas import tpu as pltpu


def _disc_kernel(x_ref, w1_ref, b1_ref, w2_ref, b2_ref, w3_ref, b3_ref, o_ref):
    # Layer 1: Linear(128, 512) + ReLU.  bf16 MXU inputs, f32 accumulation.
    h1 = jnp.dot(x_ref[...], w1_ref[...], preferred_element_type=jnp.float32)
    h1 = jnp.maximum(h1 + b1_ref[...], 0.0)

    # Layer 2: Linear(512, 256) + ReLU.  Cast activations back to bf16 for the
    # MXU, keep accumulation and the bias/ReLU math in f32.
    h2 = jnp.dot(h1.astype(jnp.bfloat16), w2_ref[...],
                 preferred_element_type=jnp.float32)
    h2 = jnp.maximum(h2 + b2_ref[...], 0.0)

    # Layer 3: Linear(256, 1) + Sigmoid.  (M,256)x(256,1) is a terrible MXU
    # shape, so do it as a VPU multiply + lane reduction instead (w3 comes in
    # as a (1, 256) row) and add the scalar bias from SMEM.
    logits = jnp.sum(h2 * w3_ref[...], axis=-1, keepdims=True) + b3_ref[0, 0]
    o_ref[...] = jax.nn.sigmoid(logits).astype(o_ref.dtype)


def _round_up(n, m):
    return ((n + m - 1) // m) * m


def discriminator_forward(x, params, *, batch_tile=512):
    """x: (B, 128) float32 -> (B, 1) float32."""
    w1, b1, w2, b2, w3, b3 = params
    B, D_in = x.shape
    assert D_in == 128

    # Clamp the tile for small batches (bf16 packing wants multiples of 16),
    # then pad B up to a multiple of the tile.
    tile = min(batch_tile, _round_up(B, 16))
    tile = _round_up(tile, 16)
    Bp = _round_up(B, tile)
    xp = x if Bp == B else jnp.pad(x, ((0, Bp - B), (0, 0)))

    # bf16 inputs for the MXU matmuls (halves DMA bytes too); biases stay f32.
    xp = xp.astype(jnp.bfloat16)
    w1b = w1.astype(jnp.bfloat16)
    w2b = w2.astype(jnp.bfloat16)
    w3_row = jnp.reshape(w3, (1, 256)).astype(jnp.float32)
    b3s = jnp.reshape(b3, (1, 1)).astype(jnp.float32)

    grid = (Bp // tile,)

    def x_map(i):
        return (i, 0)

    def w_map(i):
        return (0, 0)

    out = pl.pallas_call(
        _disc_kernel,
        out_shape=jax.ShapeDtypeStruct((Bp, 1), jnp.float32),
        grid_spec=pl.GridSpec(
            grid=grid,
            in_specs=[
                pl.BlockSpec((tile, 128), x_map),                    # x tile (bf16)
                pl.BlockSpec((128, 512), w_map),                     # W1 (bf16)
                pl.BlockSpec((1, 512), w_map),                       # b1 (f32)
                pl.BlockSpec((512, 256), w_map),                     # W2 (bf16)
                pl.BlockSpec((1, 256), w_map),                       # b2 (f32)
                pl.BlockSpec((1, 256), w_map),                       # W3 as row (f32)
                pl.BlockSpec(memory_space=pltpu.MemorySpace.SMEM),   # b3 scalar
            ],
            out_specs=pl.BlockSpec((tile, 1), x_map),
        ),
        compiler_params=pltpu.CompilerParams(
            dimension_semantics=("parallel",),
        ),
    )(xp, w1b, b1, w2b, b2, w3_row, b3s)

    return out[:B]


def init_params(key):
    """Deterministic init mimicking PyTorch nn.Linear defaults (uniform ±1/sqrt(fan_in))."""
    dims = [(128, 512), (512, 256), (256, 1)]
    params = []
    for (fan_in, fan_out) in dims:
        key, kw, kb = jax.random.split(key, 3)
        bound = 1.0 / (fan_in ** 0.5)
        w = jax.random.uniform(kw, (fan_in, fan_out), jnp.float32, -bound, bound)
        b = jax.random.uniform(kb, (1, fan_out), jnp.float32, -bound, bound)
        params += [w, b]
    return tuple(params)


def reference_forward(x, params):
    w1, b1, w2, b2, w3, b3 = params
    h1 = jnp.maximum(x @ w1 + b1, 0.0)
    h2 = jnp.maximum(h1 @ w2 + b2, 0.0)
    return jax.nn.sigmoid(h2 @ w3 + b3)


if __name__ == "__main__":
    key = jax.random.PRNGKey(0)
    key, kx1, kx2 = jax.random.split(key, 3)
    params = init_params(key)

    # Case 1: batch divisible by the tile, multi-step grid.
    B1 = 64
    x1 = jax.random.normal(kx1, (B1, 128), jnp.float32)
    out1 = jax.block_until_ready(discriminator_forward(x1, params, batch_tile=32))
    ref1 = reference_forward(x1, params)
    assert out1.shape == (B1, 1), out1.shape
    assert jnp.allclose(out1, ref1, atol=2e-2, rtol=2e-2), "mismatch vs reference (case 1)"

    # Case 2: ragged batch exercising the padding path with the default tile.
    B2 = 70
    x2 = jax.random.normal(kx2, (B2, 128), jnp.float32)
    out2 = jax.block_until_ready(discriminator_forward(x2, params))
    ref2 = reference_forward(x2, params)
    assert out2.shape == (B2, 1), out2.shape
    assert jnp.allclose(out2, ref2, atol=2e-2, rtol=2e-2), "mismatch vs reference (case 2)"

    print("KERNEL_OK")
</pallas_src>

<mosaic_0001>
module attributes {stable_mosaic.version = 11 : i64} {
  func.func @_disc_kernel(%arg0: i32, %arg1: memref<32x128xbf16, #tpu.memory_space<vmem>>, %arg2: memref<128x512xbf16, #tpu.memory_space<vmem>>, %arg3: memref<1x512xf32, #tpu.memory_space<vmem>>, %arg4: memref<512x256xbf16, #tpu.memory_space<vmem>>, %arg5: memref<1x256xf32, #tpu.memory_space<vmem>>, %arg6: memref<1x256xf32, #tpu.memory_space<vmem>>, %arg7: memref<1x1xf32, #tpu.memory_space<smem>>, %arg8: memref<32x1xf32, #tpu.memory_space<vmem>>) attributes {dimension_semantics = [#tpu.dimension_semantics<parallel>], iteration_bounds = array<i64: 2>, scalar_prefetch = 0 : i64, scratch_operands = 0 : i64, tpu.core_type = #tpu.core_type<tc>, window_params = [{transform_indices = @transform_0, window_bounds = array<i64: 32, 128>}, {pipeline_mode = #tpu.pipeline_mode<synchronous>, transform_indices = @transform_1, window_bounds = array<i64: 128, 512>}, {pipeline_mode = #tpu.pipeline_mode<synchronous>, transform_indices = @transform_2, window_bounds = array<i64: 1, 512>}, {pipeline_mode = #tpu.pipeline_mode<synchronous>, transform_indices = @transform_3, window_bounds = array<i64: 512, 256>}, {pipeline_mode = #tpu.pipeline_mode<synchronous>, transform_indices = @transform_4, window_bounds = array<i64: 1, 256>}, {pipeline_mode = #tpu.pipeline_mode<synchronous>, transform_indices = @transform_5, window_bounds = array<i64: 1, 256>}, {transform_indices = @transform_6, window_bounds = array<i64: 1, 1>}, {transform_indices = @transform_7, window_bounds = array<i64: 32, 1>}]} {
    %c0 = arith.constant 0 : index
    %c0_0 = arith.constant 0 : index
    %0 = vector.load %arg1[%c0, %c0_0] : memref<32x128xbf16, #tpu.memory_space<vmem>>, vector<32x128xbf16>
    %c0_1 = arith.constant 0 : index
    %c0_2 = arith.constant 0 : index
    %1 = vector.load %arg2[%c0_1, %c0_2] : memref<128x512xbf16, #tpu.memory_space<vmem>>, vector<128x512xbf16>
    %cst = arith.constant dense<0.000000e+00> : vector<32x512xf32>
    %2 = tpu.matmul %0, %1, %cst {dimension_numbers = #tpu.dot_dimension_numbers<[1], [0], [0], [1], [0, 0, 1, 1], [], []>} : vector<32x128xbf16>, vector<128x512xbf16>, vector<32x512xf32> -> vector<32x512xf32>
    %c0_3 = arith.constant 0 : index
    %c0_4 = arith.constant 0 : index
    %3 = vector.load %arg3[%c0_3, %c0_4] : memref<1x512xf32, #tpu.memory_space<vmem>>, vector<1x512xf32>
    %4 = vector.broadcast %3 : vector<1x512xf32> to vector<32x512xf32>
    %5 = arith.addf %2, %4 : vector<32x512xf32>
    %cst_5 = arith.constant 0.000000e+00 : f32
    %6 = vector.broadcast %cst_5 : f32 to vector<32x512xf32>
    %7 = arith.maximumf %5, %6 : vector<32x512xf32>
    %8 = arith.truncf %7 : vector<32x512xf32> to vector<32x512xbf16>
    %c0_6 = arith.constant 0 : index
    %c0_7 = arith.constant 0 : index
    %9 = vector.load %arg4[%c0_6, %c0_7] : memref<512x256xbf16, #tpu.memory_space<vmem>>, vector<512x256xbf16>
    %cst_8 = arith.constant dense<0.000000e+00> : vector<32x256xf32>
    %10 = tpu.matmul %8, %9, %cst_8 {dimension_numbers = #tpu.dot_dimension_numbers<[1], [0], [0], [1], [0, 0, 1, 1], [], []>} : vector<32x512xbf16>, vector<512x256xbf16>, vector<32x256xf32> -> vector<32x256xf32>
    %c0_9 = arith.constant 0 : index
    %c0_10 = arith.constant 0 : index
    %11 = vector.load %arg5[%c0_9, %c0_10] : memref<1x256xf32, #tpu.memory_space<vmem>>, vector<1x256xf32>
    %12 = vector.broadcast %11 : vector<1x256xf32> to vector<32x256xf32>
    %13 = arith.addf %10, %12 : vector<32x256xf32>
    %cst_11 = arith.constant 0.000000e+00 : f32
    %14 = vector.broadcast %cst_11 : f32 to vector<32x256xf32>
    %15 = arith.maximumf %13, %14 : vector<32x256xf32>
    %c0_12 = arith.constant 0 : index
    %c0_13 = arith.constant 0 : index
    %16 = vector.load %arg6[%c0_12, %c0_13] : memref<1x256xf32, #tpu.memory_space<vmem>>, vector<1x256xf32>
    %17 = vector.broadcast %16 : vector<1x256xf32> to vector<32x256xf32>
    %18 = arith.mulf %15, %17 : vector<32x256xf32>
    %cst_14 = arith.constant dense<0.000000e+00> : vector<32xf32>
    %19 = vector.multi_reduction <add>, %18, %cst_14 [1] : vector<32x256xf32> to vector<32xf32>
    %20 = vector.shape_cast %19 : vector<32xf32> to vector<32x1xf32>
    %c0_15 = arith.constant 0 : index
    %c0_16 = arith.constant 0 : index
    %21 = memref.load %arg7[%c0_15, %c0_16] : memref<1x1xf32, #tpu.memory_space<smem>>
    %22 = vector.broadcast %21 : f32 to vector<32x1xf32>
    %23 = arith.addf %20, %22 : vector<32x1xf32>
    %24 = arith.negf %23 : vector<32x1xf32>
    %25 = math.exp %24 : vector<32x1xf32>
    %cst_17 = arith.constant 1.000000e+00 : f32
    %26 = vector.broadcast %cst_17 : f32 to vector<32x1xf32>
    %27 = arith.addf %26, %25 : vector<32x1xf32>
    %28 = arith.divf %26, %27 : vector<32x1xf32>
    %c0_18 = arith.constant 0 : index
    %c0_19 = arith.constant 0 : index
    %29 = vector.load %arg8[%c0_18, %c0_19] : memref<32x1xf32, #tpu.memory_space<vmem>>, vector<32x1xf32>
    tpu.vector_store %arg8[%c0_18, %c0_19], %28 {strides = array<i32>} : memref<32x1xf32, #tpu.memory_space<vmem>>, vector<32x1xf32>,
    return
  }
  func.func @transform_0(%arg0: i32) -> (i32, i32) {
    %c0_i32 = arith.constant 0 : i32
    %c0_i32_0 = arith.constant 0 : i32
    return %arg0, %c0_i32 : i32, i32
  }
  func.func @transform_1(%arg0: i32) -> (i32, i32) {
    %c0_i32 = arith.constant 0 : i32
    %c0_i32_0 = arith.constant 0 : i32
    %c0_i32_1 = arith.constant 0 : i32
    return %c0_i32, %c0_i32_0 : i32, i32
  }
  func.func @transform_2(%arg0: i32) -> (i32, i32) {
    %c0_i32 = arith.constant 0 : i32
    %c0_i32_0 = arith.constant 0 : i32
    %c0_i32_1 = arith.constant 0 : i32
    return %c0_i32, %c0_i32_0 : i32, i32
  }
  func.func @transform_3(%arg0: i32) -> (i32, i32) {
    %c0_i32 = arith.constant 0 : i32
    %c0_i32_0 = arith.constant 0 : i32
    %c0_i32_1 = arith.constant 0 : i32
    return %c0_i32, %c0_i32_0 : i32, i32
  }
  func.func @transform_4(%arg0: i32) -> (i32, i32) {
    %c0_i32 = arith.constant 0 : i32
    %c0_i32_0 = arith.constant 0 : i32
    %c0_i32_1 = arith.constant 0 : i32
    return %c0_i32, %c0_i32_0 : i32, i32
  }
  func.func @transform_5(%arg0: i32) -> (i32, i32) {
    %c0_i32 = arith.constant 0 : i32
    %c0_i32_0 = arith.constant 0 : i32
    %c0_i32_1 = arith.constant 0 : i32
    return %c0_i32, %c0_i32_0 : i32, i32
  }
  func.func @transform_6(%arg0: i32) -> (i32, i32) {
    %c0_i32 = arith.constant 0 : i32
    %c0_i32_0 = arith.constant 0 : i32
    %c0_i32_1 = arith.constant 0 : i32
    return %c0_i32, %c0_i32_0 : i32, i32
  }
  func.func @transform_7(%arg0: i32) -> (i32, i32) {
    %c0_i32 = arith.constant 0 : i32
    %c0_i32_0 = arith.constant 0 : i32
    return %arg0, %c0_i32 : i32, i32
  }
}

</mosaic_0001>

<llo_original>
// kernel: tpu_custom_call.1
$region0: #{tpu_custom_call.1}
  #allocation0 [shape = 'u32[]', space=smem, size = 0x4, offset = 0x4, fixed_abs, tag = 'smem constant byte address 0x4 - core index']
  #allocation1 [shape = 'u32[144,128]{1,0:T(1,128)}', space=vmem, size = 0x12000, scoped, tag = 'internal scratch']
  #allocation2 [shape = 'f32[1,1]{1,0:T(1,128)S(6)}', space=smem, size = 0x200, scoped, tag = 'scoped memory for tpu_custom_call.1']
  %s0 = inlined_call_operand.hbm [shape: bf16[64,128], index: 0, kind: input, shape index: {}]
  %s1 = inlined_call_operand.hbm [shape: bf16[128,512], index: 1, kind: input, shape index: {}]
  %s2 = inlined_call_operand.vmem [shape: f32[1,512], index: 2, kind: input, shape index: {}]
  %s3 = inlined_call_operand.hbm [shape: bf16[512,256], index: 3, kind: input, shape index: {}]
  %s4 = inlined_call_operand.vmem [shape: f32[1,256], index: 4, kind: input, shape index: {}]
  %s5 = inlined_call_operand.vmem [shape: f32[1,256], index: 5, kind: input, shape index: {}]
  %s6 = inlined_call_operand.<no memory space> [shape: f32[1,1], index: 6, kind: input, shape index: {}]
  %s7 = inlined_call_operand.vmem [shape: f32[64,1], index: 7, kind: output, shape index: {}]
  %s8 = sld [smem:[#allocation0]]
  $region73: #{tpu_custom_call.1} parent=0
    _
  %s10 = ssub.s32 1, %s8
  %s11 = scalar_select 0, %s10, %s8
  %12 = sst [smem:[#allocation2]] %s6
  $region1: #{tpu_custom_call.1} parent=0
    #allocation3 [shape = 'u8[16384]{0}', space=vmem, size = 0x4000, scoped, tag = 'input window, operand 0']
    #allocation4 [shape = 's32[2]{0}', space=sflag, size = 0x8, scoped, tag = 'scoped memory for tpu_custom_call.1']
    #allocation5 [shape = 'u8[131072]{0}', space=vmem, size = 0x20000, scoped, tag = 'input window, operand 1, single buffered']
    #allocation6 [shape = 's32[1]{0}', space=sflag, size = 0x4, scoped, tag = 'scoped memory for tpu_custom_call.1']
    #allocation7 [shape = 'u8[262144]{0}', space=vmem, size = 0x40000, scoped, tag = 'input window, operand 3, single buffered']
    %13 = vsyncpa [#allocation4], 0
    %s14 = scalar_lea.sflag [#allocation4], 1
    %15 = vsyncpa %s14, 0
    %16 = vsyncpa [#allocation6], 0
    loop: start=0, step=1, limit=4
    $region2: #{tpu_custom_call.1} parent=1 // loop_pre_header
      _
    $region3: #{tpu_custom_call.1} parent=1 // loop_header
      %s18 = sphi 0, %s22
      %p19 = scmp.ge.s32.totalorder %s18, 4
      %s28 = sphi 0, %s30
      %s31 = sphi 0, %s28
      %s32 = sphi 0, %s31
      %s48 = sphi 0, %s32
      %s52 = sphi 0, %s52
      %s54 = sphi 0, %s52
      %s55 = sphi 0, %s54
      %s69 = sphi 0, %s55
      %s73 = sphi 0, %s73
      %s75 = sphi 0, %s73
      %s76 = sphi 0, %s75
      %s90 = sphi 0, %s76
      %s94 = sphi 0, %s94
      %s96 = sphi 0, %s94
      %s97 = sphi 0, %s96
      %s111 = sphi 0, %s97
      %s115 = sphi 0, %s115
      %s117 = sphi 0, %s115
      %s118 = sphi 0, %s117
      %s132 = sphi 0, %s118
      %s136 = sphi 0, %s136
      %s138 = sphi 0, %s136
      %s139 = sphi 0, %s138
      %s153 = sphi 0, %s139
      %s157 = sphi 0, %s157
      %s159 = sphi 0, %s157
      %s160 = sphi 0, %s159
      %s174 = sphi 0, %s160
      %s180 = sphi 0, %s182
      %s183 = sphi 0, %s180
      %s184 = sphi 0, %s183
      %s200 = sphi 0, %s184
    $region4: #{tpu_custom_call.1} parent=1 // loop_header_branch
      %21 = sbr.rel (%p19) target = $region8
    $region5: #{tpu_custom_call.1} parent=1 // loop_body
      %s23 = ssub.s32 %s18, 1
      %s24 = ssub.s32 %s18, 2
      %s25 = sadd.s32 %s18, 1
      %s26 = ssub.s32 %s18, %s25
      %p27 = scmp.eq.s32.totalorder %s26, 0
      %s29 = sadd.s32 %s28, 1
      %s30 = scalar_select %p27, %s28, %s29
      %p33 = pneg %p27
      %p34 = scmp.eq.s32.totalorder %s18, 1
      %p35 = por %p33, %p34
      %p36 = scmp.ne.s32.totalorder %s28, %s31
      %p37 = scmp.eq.s32.totalorder %s18, 0
      %p38 = por %p36, %p37
      %p39 = scmp.ne.s32.totalorder %s28, %s31
      %p40 = scmp.eq.s32.totalorder %s23, 1
      %p41 = por %p39, %p40
      %p42 = scmp.ne.s32.totalorder %s31, %s32
      %p43 = scmp.eq.s32.totalorder %s23, 0
      %p44 = por %p42, %p43
      %p45 = scmp.ne.s32.totalorder %s31, %s32
      %p46 = scmp.eq.s32.totalorder %s24, 1
      %p47 = por %p45, %p46
      %p49 = scmp.ne.s32.totalorder %s32, %s48
      %p50 = scmp.eq.s32.totalorder %s24, 0
      %p51 = por %p49, %p50
      %s53 = sadd.s32 %s52, 1
      %p56 = scmp.eq.s32.totalorder %s18, 1
      %p57 = scmp.ne.s32.totalorder %s52, %s54
      %p58 = scmp.eq.s32.totalorder %s18, 0
      %p59 = por %p57, %p58
      %p60 = scmp.ne.s32.totalorder %s52, %s54
      %p61 = scmp.eq.s32.totalorder %s23, 1
      %p62 = por %p60, %p61
      %p63 = scmp.ne.s32.totalorder %s54, %s55
      %p64 = scmp.eq.s32.totalorder %s23, 0
      %p65 = por %p63, %p64
      %p66 = scmp.ne.s32.totalorder %s54, %s55
      %p67 = scmp.eq.s32.totalorder %s24, 1
      %p68 = por %p66, %p67
      %p70 = scmp.ne.s32.totalorder %s55, %s69
      %p71 = scmp.eq.s32.totalorder %s24, 0
      %p72 = por %p70, %p71
      %s74 = sadd.s32 %s73, 1
      %p77 = scmp.eq.s32.totalorder %s18, 1
      %p78 = scmp.ne.s32.totalorder %s73, %s75
      %p79 = scmp.eq.s32.totalorder %s18, 0
      %p80 = por %p78, %p79
      %p81 = scmp.ne.s32.totalorder %s73, %s75
      %p82 = scmp.eq.s32.totalorder %s23, 1
      %p83 = por %p81, %p82
      %p84 = scmp.ne.s32.totalorder %s75, %s76
      %p85 = scmp.eq.s32.totalorder %s23, 0
      %p86 = por %p84, %p85
      %p87 = scmp.ne.s32.totalorder %s75, %s76
      %p88 = scmp.eq.s32.totalorder %s24, 1
      %p89 = por %p87, %p88
      %p91 = scmp.ne.s32.totalorder %s76, %s90
      %p92 = scmp.eq.s32.totalorder %s24, 0
      %p93 = por %p91, %p92
      %s95 = sadd.s32 %s94, 1
      %p98 = scmp.eq.s32.totalorder %s18, 1
      %p99 = scmp.ne.s32.totalorder %s94, %s96
      %p100 = scmp.eq.s32.totalorder %s18, 0
      %p101 = por %p99, %p100
      %p102 = scmp.ne.s32.totalorder %s94, %s96
      %p103 = scmp.eq.s32.totalorder %s23, 1
      %p104 = por %p102, %p103
      %p105 = scmp.ne.s32.totalorder %s96, %s97
      %p106 = scmp.eq.s32.totalorder %s23, 0
      %p107 = por %p105, %p106
      %p108 = scmp.ne.s32.totalorder %s96, %s97
      %p109 = scmp.eq.s32.totalorder %s24, 1
      %p110 = por %p108, %p109
      %p112 = scmp.ne.s32.totalorder %s97, %s111
      %p113 = scmp.eq.s32.totalorder %s24, 0
      %p114 = por %p112, %p113
      %s116 = sadd.s32 %s115, 1
      %p119 = scmp.eq.s32.totalorder %s18, 1
      %p120 = scmp.ne.s32.totalorder %s115, %s117
      %p121 = scmp.eq.s32.totalorder %s18, 0
      %p122 = por %p120, %p121
      %p123 = scmp.ne.s32.totalorder %s115, %s117
      %p124 = scmp.eq.s32.totalorder %s23, 1
      %p125 = por %p123, %p124
      %p126 = scmp.ne.s32.totalorder %s117, %s118
      %p127 = scmp.eq.s32.totalorder %s23, 0
      %p128 = por %p126, %p127
      %p129 = scmp.ne.s32.totalorder %s117, %s118
      %p130 = scmp.eq.s32.totalorder %s24, 1
      %p131 = por %p129, %p130
      %p133 = scmp.ne.s32.totalorder %s118, %s132
      %p134 = scmp.eq.s32.totalorder %s24, 0
      %p135 = por %p133, %p134
      %s137 = sadd.s32 %s136, 1
      %p140 = scmp.eq.s32.totalorder %s18, 1
      %p141 = scmp.ne.s32.totalorder %s136, %s138
      %p142 = scmp.eq.s32.totalorder %s18, 0
      %p143 = por %p141, %p142
      %p144 = scmp.ne.s32.totalorder %s136, %s138
      %p145 = scmp.eq.s32.totalorder %s23, 1
      %p146 = por %p144, %p145
      %p147 = scmp.ne.s32.totalorder %s138, %s139
      %p148 = scmp.eq.s32.totalorder %s23, 0
      %p149 = por %p147, %p148
      %p150 = scmp.ne.s32.totalorder %s138, %s139
      %p151 = scmp.eq.s32.totalorder %s24, 1
      %p152 = por %p150, %p151
      %p154 = scmp.ne.s32.totalorder %s139, %s153
      %p155 = scmp.eq.s32.totalorder %s24, 0
      %p156 = por %p154, %p155
      %s158 = sadd.s32 %s157, 1
      %p161 = scmp.eq.s32.totalorder %s18, 1
      %p162 = scmp.ne.s32.totalorder %s157, %s159
      %p163 = scmp.eq.s32.totalorder %s18, 0
      %p164 = por %p162, %p163
      %p165 = scmp.ne.s32.totalorder %s157, %s159
      %p166 = scmp.eq.s32.totalorder %s23, 1
      %p167 = por %p165, %p166
      %p168 = scmp.ne.s32.totalorder %s159, %s160
      %p169 = scmp.eq.s32.totalorder %s23, 0
      %p170 = por %p168, %p169
      %p171 = scmp.ne.s32.totalorder %s159, %s160
      %p172 = scmp.eq.s32.totalorder %s24, 1
      %p173 = por %p171, %p172
      %p175 = scmp.ne.s32.totalorder %s160, %s174
      %p176 = scmp.eq.s32.totalorder %s24, 0
      %p177 = por %p175, %p176
      %s178 = ssub.s32 %s18, %s25
      %p179 = scmp.eq.s32.totalorder %s178, 0
      %s181 = sadd.s32 %s180, 1
      %s182 = scalar_select %p179, %s180, %s181
      %p185 = pneg %p179
      %p186 = scmp.eq.s32.totalorder %s18, 1
      %p187 = por %p185, %p186
      %p188 = scmp.ne.s32.totalorder %s180, %s183
      %p189 = scmp.eq.s32.totalorder %s18, 0
      %p190 = por %p188, %p189
      %p191 = scmp.ne.s32.totalorder %s180, %s183
      %p192 = scmp.eq.s32.totalorder %s23, 1
      %p193 = por %p191, %p192
      %p194 = scmp.ne.s32.totalorder %s183, %s184
      %p195 = scmp.eq.s32.totalorder %s23, 0
      %p196 = por %p194, %p195
      %p197 = scmp.ne.s32.totalorder %s183, %s184
      %p198 = scmp.eq.s32.totalorder %s24, 1
      %p199 = por %p197, %p198
      %p201 = scmp.ne.s32.totalorder %s184, %s200
      %p202 = scmp.eq.s32.totalorder %s24, 0
      %p203 = por %p201, %p202
      %p204 = scmp.le.s32.totalorder 1, %s18
      %p205 = scmp.lt.s32.totalorder %s18, 3
      %p206 = pnand %p204, %p205
      %p207 = pneg %p206
      // Predicated region
      $region9: #{tpu_custom_call.1} parent=5 // pred_check
        _
      $region10: #{tpu_custom_call.1} parent=5 // pred_check_branch
        %209 = sbr.rel (%p206) target = $region12
      $region11: #{tpu_custom_call.1} parent=5 // pred_region
        %s210 = ssub.s32 %s18, 1
        // Predicated region
        $region13: #{tpu_custom_call.1} parent=11 // pred_check
          %p211 = pneg %p65
        $region14: #{tpu_custom_call.1} parent=11 // pred_check_branch
          %213 = sbr.rel (%p211) target = $region16
        $region15: #{tpu_custom_call.1} parent=11 // pred_region
          %s215 = ssub.s32 4096, 4096
          %216 = vsyncadd [#allocation6], %s215
          %s217 = sshll.u32 [#allocation5], 4
          %s218 = int_to_ptr.vmem [resolvable:$true] %s217
          %223 = dma.hbm_to_vmem [thread:$0]  %s1, 4096, %s218, [#allocation6], 256, 256, 16
        $region16: #{tpu_custom_call.1} parent=11 // pred_fallthru
          _
        // Predicated region
        $region17: #{tpu_custom_call.1} parent=11 // pred_check
          %p224 = pneg %p86
        $region18: #{tpu_custom_call.1} parent=11 // pred_check_branch
          %226 = sbr.rel (%p224) target = $region20
        $region19: #{tpu_custom_call.1} parent=11 // pred_region
          _
        $region20: #{tpu_custom_call.1} parent=11 // pred_fallthru
          _
        // Predicated region
        $region21: #{tpu_custom_call.1} parent=11 // pred_check
          %p227 = pneg %p107
        $region22: #{tpu_custom_call.1} parent=11 // pred_check_branch
          %229 = sbr.rel (%p227) target = $region24
        $region23: #{tpu_custom_call.1} parent=11 // pred_region
          %s231 = ssub.s32 8192, 8192
          %232 = vsyncadd [#allocation6], %s231
          %s233 = sshll.u32 [#allocation7], 4
          %s234 = int_to_ptr.vmem [resolvable:$true] %s233
          %239 = dma.hbm_to_vmem [thread:$0]  %s3, 8192, %s234, [#allocation6], 128, 128, 8
        $region24: #{tpu_custom_call.1} parent=11 // pred_fallthru
          _
        // Predicated region
        $region25: #{tpu_custom_call.1} parent=11 // pred_check
          %p240 = pneg %p128
        $region26: #{tpu_custom_call.1} parent=11 // pred_check_branch
          %242 = sbr.rel (%p240) target = $region28
        $region27: #{tpu_custom_call.1} parent=11 // pred_region
          _
        $region28: #{tpu_custom_call.1} parent=11 // pred_fallthru
          _
        // Predicated region
        $region29: #{tpu_custom_call.1} parent=11 // pred_check
          %p243 = pneg %p149
        $region30: #{tpu_custom_call.1} parent=11 // pred_check_branch
          %245 = sbr.rel (%p243) target = $region32
        $region31: #{tpu_custom_call.1} parent=11 // pred_region
          _
        $region32: #{tpu_custom_call.1} parent=11 // pred_fallthru
          _
        // Predicated region
        $region33: #{tpu_custom_call.1} parent=11 // pred_check
          %p246 = pneg %p170
        $region34: #{tpu_custom_call.1} parent=11 // pred_check_branch
          %248 = sbr.rel (%p246) target = $region36
        $region35: #{tpu_custom_call.1} parent=11 // pred_region
          _
        $region36: #{tpu_custom_call.1} parent=11 // pred_fallthru
          _
      $region12: #{tpu_custom_call.1} parent=5 // pred_fallthru
        _
      %p249 = scmp.lt.s32.totalorder %s18, 2
      // Predicated region
      $region37: #{tpu_custom_call.1} parent=5 // pred_check
        %p250 = pneg %p249
      $region38: #{tpu_custom_call.1} parent=5 // pred_check_branch
        %252 = sbr.rel (%p250) target = $region40
      $region39: #{tpu_custom_call.1} parent=5 // pred_region
        // Predicated region
        $region41: #{tpu_custom_call.1} parent=39 // pred_check
          %p253 = pneg %p38
        $region42: #{tpu_custom_call.1} parent=39 // pred_check_branch
          %255 = sbr.rel (%p253) target = $region44
        $region43: #{tpu_custom_call.1} parent=39 // pred_region
          %s256 = sand.u32 %s28, 1
          %s257 = scalar_lea.sflag [#allocation4], %s256
          %s258 = sand.u32 %s28, 1
          %s259 = smul.addr %s258, 16
          %s260 = scalar_lea.vmem [#allocation3], %s259
          %s261 = smul.u32 4, %s18
          %s263 = ssub.s32 256, 256
          %264 = vsyncadd %s257, %s263
          %s265 = smul.addr %s261, 64
          %s266 = scalar_lea.hbm %s0, %s265
          %s267 = sshll.u32 %s260, 4
          %s268 = int_to_ptr.vmem [resolvable:$true] %s267
          %273 = dma.hbm_to_vmem [thread:$0]  %s266, 256, %s268, %s257, 64, 64, 4
        $region44: #{tpu_custom_call.1} parent=39 // pred_fallthru
          _
      $region40: #{tpu_custom_call.1} parent=5 // pred_fallthru
        _
      %p274 = scmp.le.s32.totalorder 1, %s18
      %p275 = scmp.lt.s32.totalorder %s18, 3
      %p276 = pnand %p274, %p275
      %p277 = pneg %p276
      // Predicated region
      $region45: #{tpu_custom_call.1} parent=5 // pred_check
        _
      $region46: #{tpu_custom_call.1} parent=5 // pred_check_branch
        %279 = sbr.rel (%p276) target = $region48
      $region47: #{tpu_custom_call.1} parent=5 // pred_region
        %s280 = ssub.s32 %s18, 1
        %s281 = sand.u32 %s31, 1
        %s282 = scalar_lea.sflag [#allocation4], %s281
        %s283 = sand.u32 %s31, 1
        %s284 = smul.addr %s283, 16
        %s285 = scalar_lea.vmem [#allocation3], %s284
        // Predicated region
        $region49: #{tpu_custom_call.1} parent=47 // pred_check
          %p286 = pneg %p44
        $region50: #{tpu_custom_call.1} parent=47 // pred_check_branch
          %288 = sbr.rel (%p286) target = $region52
        $region51: #{tpu_custom_call.1} parent=47 // pred_region
          %289 = dma.done %s282, 256
        $region52: #{tpu_custom_call.1} parent=47 // pred_fallthru
          _
        // Predicated region
        $region53: #{tpu_custom_call.1} parent=47 // pred_check
          %p290 = pneg %p65
        $region54: #{tpu_custom_call.1} parent=47 // pred_check_branch
          %292 = sbr.rel (%p290) target = $region56
        $region55: #{tpu_custom_call.1} parent=47 // pred_region
          %293 = dma.done [#allocation6], 4096
        $region56: #{tpu_custom_call.1} parent=47 // pred_fallthru
          _
        // Predicated region
        $region57: #{tpu_custom_call.1} parent=47 // pred_check
          %p294 = pneg %p107
        $region58: #{tpu_custom_call.1} parent=47 // pred_check_branch
          %296 = sbr.rel (%p294) target = $region60
        $region59: #{tpu_custom_call.1} parent=47 // pred_region
          %297 = dma.done [#allocation6], 8192
        $region60: #{tpu_custom_call.1} parent=47 // pred_fallthru
          _
        %s298 = sand.u32 %s31, 1
        %s299 = scalar_lea.sflag [#allocation4], %s298
        %s300 = sand.u32 %s31, 1
        %s301 = smul.addr %s300, 16
        %s302 = scalar_lea.vmem [#allocation3], %s301
        %p303 = pneg %p44
        %p304 = pneg %p41
        %p305 = pneg %p65
        %p306 = pneg %p62
        %p307 = pneg %p86
        %p308 = pneg %p83
        %p309 = pneg %p107
        %p310 = pneg %p104
        %p311 = pneg %p128
        %p312 = pneg %p125
        %p313 = pneg %p149
        %p314 = pneg %p146
        %p315 = pneg %p170
        %p316 = pneg %p167
        %p317 = pneg %p196
        %p318 = pneg %p193
        %s319 = smul.u32 4, %s23
        %p320 = scmp.lt.s32.totalorder %s319, 7
        %s321 = scalar_select %p320, %s319, 7
        %s322 = smul.addr %s321, 8
        %s323 = scalar_lea.vmem %s7, %s322
        %s324 = smul.u32 4, %s23
        %s325 = smul.u32 4, %s23
        %p326 = scmp.lt.s32.totalorder %s325, 7
        %s327 = scalar_select %p326, %s325, 7
        %s328 = smul.addr %s327, 8
        %s329 = scalar_lea.vmem %s7, %s328
        %s330 = smul.u32 4, %s23
        %v332 = vld [vmem:[%s285] sm:$0xf]
        %v333 = vld [vmem:[%s285 + $0x4] sm:$0xf]
        %v334 = vld [vmem:[%s285 + $0x8] sm:$0xf]
        %v335 = vld [vmem:[%s285 + $0xc] sm:$0xf]
        %v336 = vld [vmem:[#allocation5] sm:$0xff]
        %v337 = vld [vmem:[#allocation5 + $0x8] sm:$0xff]
        %v338 = vld [vmem:[#allocation5 + $0x10] sm:$0xff]
        %v339 = vld [vmem:[#allocation5 + $0x18] sm:$0xff]
        %v340 = vld [vmem:[#allocation5 + $0x20] sm:$0xff]
        %v341 = vld [vmem:[#allocation5 + $0x28] sm:$0xff]
        %v342 = vld [vmem:[#allocation5 + $0x30] sm:$0xff]
        %v343 = vld [vmem:[#allocation5 + $0x38] sm:$0xff]
        %v344 = vld [vmem:[#allocation5 + $0x40] sm:$0xff]
        %v345 = vld [vmem:[#allocation5 + $0x48] sm:$0xff]
        %v346 = vld [vmem:[#allocation5 + $0x50] sm:$0xff]
        %v347 = vld [vmem:[#allocation5 + $0x58] sm:$0xff]
        %v348 = vld [vmem:[#allocation5 + $0x60] sm:$0xff]
        %v349 = vld [vmem:[#allocation5 + $0x68] sm:$0xff]
        %v350 = vld [vmem:[#allocation5 + $0x70] sm:$0xff]
        %v351 = vld [vmem:[#allocation5 + $0x78] sm:$0xff]
        %v352 = vld [vmem:[#allocation5 + $0x80] sm:$0xff]
        %v353 = vld [vmem:[#allocation5 + $0x88] sm:$0xff]
        %v354 = vld [vmem:[#allocation5 + $0x90] sm:$0xff]
        %v355 = vld [vmem:[#allocation5 + $0x98] sm:$0xff]
        %v356 = vld [vmem:[#allocation5 + $0xa0] sm:$0xff]
        %v357 = vld [vmem:[#allocation5 + $0xa8] sm:$0xff]
        %v358 = vld [vmem:[#allocation5 + $0xb0] sm:$0xff]
        %v359 = vld [vmem:[#allocation5 + $0xb8] sm:$0xff]
        %v360 = vld [vmem:[#allocation5 + $0xc0] sm:$0xff]
        %v361 = vld [vmem:[#allocation5 + $0xc8] sm:$0xff]
        %v362 = vld [vmem:[#allocation5 + $0xd0] sm:$0xff]
        %v363 = vld [vmem:[#allocation5 + $0xd8] sm:$0xff]
        %v364 = vld [vmem:[#allocation5 + $0xe0] sm:$0xff]
        %v365 = vld [vmem:[#allocation5 + $0xe8] sm:$0xff]
        %v366 = vld [vmem:[#allocation5 + $0xf0] sm:$0xff]
        %v367 = vld [vmem:[#allocation5 + $0xf8] sm:$0xff]
        %v368 = vld [vmem:[%s2] sm:$0xf]
        %v370 = vlaneseq
        %v371 = vshrl.u32 %v370, 7
        %v372 = vsub.s32 0, %v371
        %v373 = vrot.slane %v368, %v372
        %v374 = vlaneseq
        %v375 = vshrl.u32 %v374, 7
        %v376 = vsub.s32 1, %v375
        %v377 = vrot.slane %v368, %v376
        %v378 = vlaneseq
        %v379 = vshrl.u32 %v378, 7
        %v380 = vsub.s32 2, %v379
        %v381 = vrot.slane %v368, %v380
        %v382 = vlaneseq
        %v383 = vshrl.u32 %v382, 7
        %v384 = vsub.s32 3, %v383
        %v385 = vrot.slane %v368, %v384
        %v394 = vunpack.c.l.b16 %v332
        %v395 = vunpack.c.l.b16 %v333
        %v396 = vunpack.c.l.b16 %v334
        %v397 = vunpack.c.l.b16 %v335
        %v398 = vpack.c.b16 %v395, %v394
        %v399 = vpack.c.b16 %v397, %v396
        %v434 = vunpack.c.l.b16 %v336
        %v435 = vunpack.c.h.b16 %v336
        %v436 = vunpack.c.l.b16 %v337
        %v437 = vunpack.c.h.b16 %v337
        %v438 = vunpack.c.l.b16 %v338
        %v439 = vunpack.c.h.b16 %v338
        %v440 = vunpack.c.l.b16 %v339
        %v441 = vunpack.c.h.b16 %v339
        %v442 = vunpack.c.l.b16 %v340
        %v443 = vunpack.c.h.b16 %v340
        %v444 = vunpack.c.l.b16 %v341
        %v445 = vunpack.c.h.b16 %v341
        %v446 = vunpack.c.l.b16 %v342
        %v447 = vunpack.c.h.b16 %v342
        %v448 = vunpack.c.l.b16 %v343
        %v449 = vunpack.c.h.b16 %v343
        %v450 = vunpack.c.l.b16 %v344
        %v451 = vunpack.c.h.b16 %v344
        %v452 = vunpack.c.l.b16 %v345
        %v453 = vunpack.c.h.b16 %v345
        %v454 = vunpack.c.l.b16 %v346
        %v455 = vunpack.c.h.b16 %v346
        %v456 = vunpack.c.l.b16 %v347
        %v457 = vunpack.c.h.b16 %v347
        %v458 = vunpack.c.l.b16 %v348
        %v459 = vunpack.c.h.b16 %v348
        %v460 = vunpack.c.l.b16 %v349
        %v461 = vunpack.c.h.b16 %v349
        %v462 = vunpack.c.l.b16 %v350
        %v463 = vunpack.c.h.b16 %v350
        %v464 = vunpack.c.l.b16 %v351
        %v465 = vunpack.c.h.b16 %v351
        %v466 = vunpack.c.l.b16 %v352
        %v467 = vunpack.c.h.b16 %v352
        %v468 = vunpack.c.l.b16 %v353
        %v469 = vunpack.c.h.b16 %v353
        %v470 = vunpack.c.l.b16 %v354
        %v471 = vunpack.c.h.b16 %v354
        %v472 = vunpack.c.l.b16 %v355
        %v473 = vunpack.c.h.b16 %v355
        %v474 = vunpack.c.l.b16 %v356
        %v475 = vunpack.c.h.b16 %v356
        %v476 = vunpack.c.l.b16 %v357
        %v477 = vunpack.c.h.b16 %v357
        %v478 = vunpack.c.l.b16 %v358
        %v479 = vunpack.c.h.b16 %v358
        %v480 = vunpack.c.l.b16 %v359
        %v481 = vunpack.c.h.b16 %v359
        %v482 = vunpack.c.l.b16 %v360
        %v483 = vunpack.c.h.b16 %v360
        %v484 = vunpack.c.l.b16 %v361
        %v485 = vunpack.c.h.b16 %v361
        %v486 = vunpack.c.l.b16 %v362
        %v487 = vunpack.c.h.b16 %v362
        %v488 = vunpack.c.l.b16 %v363
        %v489 = vunpack.c.h.b16 %v363
        %v490 = vunpack.c.l.b16 %v364
        %v491 = vunpack.c.h.b16 %v364
        %v492 = vunpack.c.l.b16 %v365
        %v493 = vunpack.c.h.b16 %v365
        %v494 = vunpack.c.l.b16 %v366
        %v495 = vunpack.c.h.b16 %v366
        %v496 = vunpack.c.l.b16 %v367
        %v497 = vunpack.c.h.b16 %v367
        %v498 = vpack.c.b16 %v438, %v434
        %v499 = vpack.c.b16 %v439, %v435
        %v500 = vpack.c.b16 %v440, %v436
        %v501 = vpack.c.b16 %v441, %v437
        %v502 = vpack.c.b16 %v446, %v442
        %v503 = vpack.c.b16 %v447, %v443
        %v504 = vpack.c.b16 %v448, %v444
        %v505 = vpack.c.b16 %v449, %v445
        %v506 = vpack.c.b16 %v454, %v450
        %v507 = vpack.c.b16 %v455, %v451
        %v508 = vpack.c.b16 %v456, %v452
        %v509 = vpack.c.b16 %v457, %v453
        %v510 = vpack.c.b16 %v462, %v458
        %v511 = vpack.c.b16 %v463, %v459
        %v512 = vpack.c.b16 %v464, %v460
        %v513 = vpack.c.b16 %v465, %v461
        %v514 = vpack.c.b16 %v470, %v466
        %v515 = vpack.c.b16 %v471, %v467
        %v516 = vpack.c.b16 %v472, %v468
        %v517 = vpack.c.b16 %v473, %v469
        %v518 = vpack.c.b16 %v478, %v474
        %v519 = vpack.c.b16 %v479, %v475
        %v520 = vpack.c.b16 %v480, %v476
        %v521 = vpack.c.b16 %v481, %v477
        %v522 = vpack.c.b16 %v486, %v482
        %v523 = vpack.c.b16 %v487, %v483
        %v524 = vpack.c.b16 %v488, %v484
        %v525 = vpack.c.b16 %v489, %v485
        %v526 = vpack.c.b16 %v494, %v490
        %v527 = vpack.c.b16 %v495, %v491
        %v528 = vpack.c.b16 %v496, %v492
        %v529 = vpack.c.b16 %v497, %v493
        %562 = vmatprep.subr.bf16.mxu0 %v499
        %563 = vmatpush1.bf16.msra.mxu0 %v498
        %564 = vmatprep.subr.bf16.mxu0 %v503
        %565 = vmatpush1.bf16.msra.mxu0 %v502
        %566 = vmatprep.subr.bf16.mxu0 %v507
        %567 = vmatpush1.bf16.msra.mxu0 %v506
        %568 = vmatprep.subr.bf16.mxu0 %v511
        %569 = vmatpush1.bf16.msra.mxu0 %v510
        %570 = vmatprep.subr.bf16.mxu0 %v515
        %571 = vmatpush1.bf16.msra.mxu0 %v514
        %572 = vmatprep.subr.bf16.mxu0 %v519
        %573 = vmatpush1.bf16.msra.mxu0 %v518
        %574 = vmatprep.subr.bf16.mxu0 %v523
        %575 = vmatpush1.bf16.msra.mxu0 %v522
        %576 = vmatprep.subr.bf16.mxu0 %v527
        %577 = vmatpush1.bf16.msra.mxu0 %v526
        %578 = vmatprep.subr.bf16.mxu0 0
        %579 = vmatpush1.bf16.msra.mxu0 0
        %580 = vmatprep.subr.bf16.mxu0 0
        %581 = vmatpush1.bf16.msra.mxu0 0
        %582 = vmatprep.subr.bf16.mxu0 0
        %583 = vmatpush1.bf16.msra.mxu0 0
        %584 = vmatprep.subr.bf16.mxu0 0
        %585 = vmatpush1.bf16.msra.mxu0 0
        %586 = vmatprep.subr.bf16.mxu0 0
        %587 = vmatpush1.bf16.msra.mxu0 0
        %588 = vmatprep.subr.bf16.mxu0 0
        %589 = vmatpush1.bf16.msra.mxu0 0
        %590 = vmatprep.subr.bf16.mxu0 0
        %591 = vmatpush1.bf16.msra.mxu0 0
        %592 = vmatprep.subr.bf16.mxu0 0
        %593 = vmatpush1.bf16.msra.mxu0 0
        %594 = vmatprep.mubr.bf16.mxu0 0
        %595 = vmatmul.mubr.bf16.gmra.mrb[0].mxu0 %v398
        %v596 = vpop.f32.mrb[0].mxu0
        %v597 = vadd.f32 %v373, %v596
        %v598 = vpop.f32.mrb[0].mxu0
        %v599 = vadd.f32 %v377, %v598
        %v600 = vpop.f32.mrb[0].mxu0
        %v601 = vadd.f32 %v373, %v600
        %v602 = vpop.f32.mrb[0].mxu0
        %v603 = vadd.f32 %v377, %v602
        %604 = vmatprep.mubr.bf16.mxu0 0
        %605 = vmatmul.mubr.bf16.gmra.mrb[0].mxu0 %v399
        %v606 = vpop.f32.mrb[0].mxu0
        %v607 = vadd.f32 %v373, %v606
        %v608 = vpop.f32.mrb[0].mxu0
        %v609 = vadd.f32 %v377, %v608
        %v610 = vpop.f32.mrb[0].mxu0
        %v611 = vadd.f32 %v373, %v610
        %v612 = vpop.f32.mrb[0].mxu0
        %v613 = vadd.f32 %v377, %v612
        %614 = vdwg.mxu0
        %615 = vmatprep.subr.bf16.mxu0 %v501
        %616 = vmatpush1.bf16.msra.mxu0 %v500
        %617 = vmatprep.subr.bf16.mxu0 %v505
        %618 = vmatpush1.bf16.msra.mxu0 %v504
        %619 = vmatprep.subr.bf16.mxu0 %v509
        %620 = vmatpush1.bf16.msra.mxu0 %v508
        %621 = vmatprep.subr.bf16.mxu0 %v513
        %622 = vmatpush1.bf16.msra.mxu0 %v512
        %623 = vmatprep.subr.bf16.mxu0 %v517
        %624 = vmatpush1.bf16.msra.mxu0 %v516
        %625 = vmatprep.subr.bf16.mxu0 %v521
        %626 = vmatpush1.bf16.msra.mxu0 %v520
        %627 = vmatprep.subr.bf16.mxu0 %v525
        %628 = vmatpush1.bf16.msra.mxu0 %v524
        %629 = vmatprep.subr.bf16.mxu0 %v529
        %630 = vmatpush1.bf16.msra.mxu0 %v528
        %631 = vmatprep.subr.bf16.mxu0 0
        %632 = vmatpush1.bf16.msra.mxu0 0
        %633 = vmatprep.subr.bf16.mxu0 0
        %634 = vmatpush1.bf16.msra.mxu0 0
        %635 = vmatprep.subr.bf16.mxu0 0
        %636 = vmatpush1.bf16.msra.mxu0 0
        %637 = vmatprep.subr.bf16.mxu0 0
        %638 = vmatpush1.bf16.msra.mxu0 0
        %639 = vmatprep.subr.bf16.mxu0 0
        %640 = vmatpush1.bf16.msra.mxu0 0
        %641 = vmatprep.subr.bf16.mxu0 0
        %642 = vmatpush1.bf16.msra.mxu0 0
        %643 = vmatprep.subr.bf16.mxu0 0
        %644 = vmatpush1.bf16.msra.mxu0 0
        %645 = vmatprep.subr.bf16.mxu0 0
        %646 = vmatpush1.bf16.msra.mxu0 0
        %647 = vmatprep.mubr.bf16.mxu0 0
        %648 = vmatmul.mubr.bf16.gmra.mrb[0].mxu0 %v398
        %v649 = vpop.f32.mrb[0].mxu0
        %v650 = vadd.f32 %v381, %v649
        %v651 = vpop.f32.mrb[0].mxu0
        %v652 = vadd.f32 %v385, %v651
        %v653 = vpop.f32.mrb[0].mxu0
        %v654 = vadd.f32 %v381, %v653
        %v655 = vpop.f32.mrb[0].mxu0
        %v656 = vadd.f32 %v385, %v655
        %657 = vmatprep.mubr.bf16.mxu0 0
        %658 = vmatmul.mubr.bf16.gmra.mrb[0].mxu0 %v399
        %v659 = vpop.f32.mrb[0].mxu0
        %v660 = vadd.f32 %v381, %v659
        %v661 = vpop.f32.mrb[0].mxu0
        %v662 = vadd.f32 %v385, %v661
        %v663 = vpop.f32.mrb[0].mxu0
        %v664 = vadd.f32 %v381, %v663
        %v665 = vpop.f32.mrb[0].mxu0
        %v666 = vadd.f32 %v385, %v665
        %667 = vdwg.mxu0
        %v668 = vmax.f32 %v597, 0.0
        %v669 = vmax.f32 %v599, 0.0
        %v670 = vmax.f32 %v650, 0.0
        %v671 = vmax.f32 %v652, 0.0
        %v672 = vmax.f32 %v601, 0.0
        %v673 = vmax.f32 %v603, 0.0
        %v674 = vmax.f32 %v654, 0.0
        %v675 = vmax.f32 %v656, 0.0
        %v676 = vmax.f32 %v607, 0.0
        %v677 = vmax.f32 %v609, 0.0
        %v678 = vmax.f32 %v660, 0.0
        %v679 = vmax.f32 %v662, 0.0
        %v680 = vmax.f32 %v611, 0.0
        %v681 = vmax.f32 %v613, 0.0
        %v682 = vmax.f32 %v664, 0.0
        %v683 = vmax.f32 %v666, 0.0
        %v684 = vpack.c.bf16 %v672, %v668
        %v685 = vpack.c.bf16 %v673, %v669
        %v686 = vpack.c.bf16 %v674, %v670
        %v687 = vpack.c.bf16 %v675, %v671
        %v688 = vpack.c.bf16 %v680, %v676
        %v689 = vpack.c.bf16 %v681, %v677
        %v690 = vpack.c.bf16 %v682, %v678
        %v691 = vpack.c.bf16 %v683, %v679
        %v692 = vld [vmem:[#allocation7] sm:$0xff]
        %v693 = vld [vmem:[#allocation7 + $0x8] sm:$0xff]
        %v694 = vld [vmem:[#allocation7 + $0x10] sm:$0xff]
        %v695 = vld [vmem:[#allocation7 + $0x18] sm:$0xff]
        %v696 = vld [vmem:[#allocation7 + $0x20] sm:$0xff]
        %v697 = vld [vmem:[#allocation7 + $0x28] sm:$0xff]
        %v698 = vld [vmem:[#allocation7 + $0x30] sm:$0xff]
        %v699 = vld [vmem:[#allocation7 + $0x38] sm:$0xff]
        %v700 = vld [vmem:[#allocation7 + $0x40] sm:$0xff]
        %v701 = vld [vmem:[#allocation7 + $0x48] sm:$0xff]
        %v702 = vld [vmem:[#allocation7 + $0x50] sm:$0xff]
        %v703 = vld [vmem:[#allocation7 + $0x58] sm:$0xff]
        %v704 = vld [vmem:[#allocation7 + $0x60] sm:$0xff]
        %v705 = vld [vmem:[#allocation7 + $0x68] sm:$0xff]
        %v706 = vld [vmem:[#allocation7 + $0x70] sm:$0xff]
        %v707 = vld [vmem:[#allocation7 + $0x78] sm:$0xff]
        %v708 = vld [vmem:[#allocation7 + $0x80] sm:$0xff]
        %v709 = vld [vmem:[#allocation7 + $0x88] sm:$0xff]
        %v710 = vld [vmem:[#allocation7 + $0x90] sm:$0xff]
        %v711 = vld [vmem:[#allocation7 + $0x98] sm:$0xff]
        %v712 = vld [vmem:[#allocation7 + $0xa0] sm:$0xff]
        %v713 = vld [vmem:[#allocation7 + $0xa8] sm:$0xff]
        %v714 = vld [vmem:[#allocation7 + $0xb0] sm:$0xff]
        %v715 = vld [vmem:[#allocation7 + $0xb8] sm:$0xff]
        %v716 = vld [vmem:[#allocation7 + $0xc0] sm:$0xff]
        %v717 = vld [vmem:[#allocation7 + $0xc8] sm:$0xff]
        %v718 = vld [vmem:[#allocation7 + $0xd0] sm:$0xff]
        %v719 = vld [vmem:[#allocation7 + $0xd8] sm:$0xff]
        %v720 = vld [vmem:[#allocation7 + $0xe0] sm:$0xff]
        %v721 = vld [vmem:[#allocation7 + $0xe8] sm:$0xff]
        %v722 = vld [vmem:[#allocation7 + $0xf0] sm:$0xff]
        %v723 = vld [vmem:[#allocation7 + $0xf8] sm:$0xff]
        %v724 = vld [vmem:[#allocation7 + $0x100] sm:$0xff]
        %v725 = vld [vmem:[#allocation7 + $0x108] sm:$0xff]
        %v726 = vld [vmem:[#allocation7 + $0x110] sm:$0xff]
        %v727 = vld [vmem:[#allocation7 + $0x118] sm:$0xff]
        %v728 = vld [vmem:[#allocation7 + $0x120] sm:$0xff]
        %v729 = vld [vmem:[#allocation7 + $0x128] sm:$0xff]
        %v730 = vld [vmem:[#allocation7 + $0x130] sm:$0xff]
        %v731 = vld [vmem:[#allocation7 + $0x138] sm:$0xff]
        %v732 = vld [vmem:[#allocation7 + $0x140] sm:$0xff]
        %v733 = vld [vmem:[#allocation7 + $0x148] sm:$0xff]
        %v734 = vld [vmem:[#allocation7 + $0x150] sm:$0xff]
        %v735 = vld [vmem:[#allocation7 + $0x158] sm:$0xff]
        %v736 = vld [vmem:[#allocation7 + $0x160] sm:$0xff]
        %v737 = vld [vmem:[#allocation7 + $0x168] sm:$0xff]
        %v738 = vld [vmem:[#allocation7 + $0x170] sm:$0xff]
        %v739 = vld [vmem:[#allocation7 + $0x178] sm:$0xff]
        %v740 = vld [vmem:[#allocation7 + $0x180] sm:$0xff]
        %v741 = vld [vmem:[#allocation7 + $0x188] sm:$0xff]
        %v742 = vld [vmem:[#allocation7 + $0x190] sm:$0xff]
        %v743 = vld [vmem:[#allocation7 + $0x198] sm:$0xff]
        %v744 = vld [vmem:[#allocation7 + $0x1a0] sm:$0xff]
        %v745 = vld [vmem:[#allocation7 + $0x1a8] sm:$0xff]
        %v746 = vld [vmem:[#allocation7 + $0x1b0] sm:$0xff]
        %v747 = vld [vmem:[#allocation7 + $0x1b8] sm:$0xff]
        %v748 = vld [vmem:[#allocation7 + $0x1c0] sm:$0xff]
        %v749 = vld [vmem:[#allocation7 + $0x1c8] sm:$0xff]
        %v750 = vld [vmem:[#allocation7 + $0x1d0] sm:$0xff]
        %v751 = vld [vmem:[#allocation7 + $0x1d8] sm:$0xff]
        %v752 = vld [vmem:[#allocation7 + $0x1e0] sm:$0xff]
        %v753 = vld [vmem:[#allocation7 + $0x1e8] sm:$0xff]
        %v754 = vld [vmem:[#allocation7 + $0x1f0] sm:$0xff]
        %v755 = vld [vmem:[#allocation7 + $0x1f8] sm:$0xff]
        %v756 = vld [vmem:[%s4] sm:$0x3]
        %v758 = vlaneseq
        %v759 = vshrl.u32 %v758, 7
        %v760 = vsub.s32 0, %v759
        %v761 = vrot.slane %v756, %v760
        %v762 = vlaneseq
        %v763 = vshrl.u32 %v762, 7
        %v764 = vsub.s32 1, %v763
        %v765 = vrot.slane %v756, %v764
        %v832 = vunpack.c.l.b16 %v692
        %v833 = vunpack.c.h.b16 %v692
        %v834 = vunpack.c.l.b16 %v693
        %v835 = vunpack.c.h.b16 %v693
        %v836 = vunpack.c.l.b16 %v694
        %v837 = vunpack.c.h.b16 %v694
        %v838 = vunpack.c.l.b16 %v695
        %v839 = vunpack.c.h.b16 %v695
        %v840 = vunpack.c.l.b16 %v696
        %v841 = vunpack.c.h.b16 %v696
        %v842 = vunpack.c.l.b16 %v697
        %v843 = vunpack.c.h.b16 %v697
        %v844 = vunpack.c.l.b16 %v698
        %v845 = vunpack.c.h.b16 %v698
        %v846 = vunpack.c.l.b16 %v699
        %v847 = vunpack.c.h.b16 %v699
        %v848 = vunpack.c.l.b16 %v700
        %v849 = vunpack.c.h.b16 %v700
        %v850 = vunpack.c.l.b16 %v701
        %v851 = vunpack.c.h.b16 %v701
        %v852 = vunpack.c.l.b16 %v702
        %v853 = vunpack.c.h.b16 %v702
        %v854 = vunpack.c.l.b16 %v703
        %v855 = vunpack.c.h.b16 %v703
        %v856 = vunpack.c.l.b16 %v704
        %v857 = vunpack.c.h.b16 %v704
        %v858 = vunpack.c.l.b16 %v705
        %v859 = vunpack.c.h.b16 %v705
        %v860 = vunpack.c.l.b16 %v706
        %v861 = vunpack.c.h.b16 %v706
        %v862 = vunpack.c.l.b16 %v707
        %v863 = vunpack.c.h.b16 %v707
        %v864 = vunpack.c.l.b16 %v708
        %v865 = vunpack.c.h.b16 %v708
        %v866 = vunpack.c.l.b16 %v709
        %v867 = vunpack.c.h.b16 %v709
        %v868 = vunpack.c.l.b16 %v710
        %v869 = vunpack.c.h.b16 %v710
        %v870 = vunpack.c.l.b16 %v711
        %v871 = vunpack.c.h.b16 %v711
        %v872 = vunpack.c.l.b16 %v712
        %v873 = vunpack.c.h.b16 %v712
        %v874 = vunpack.c.l.b16 %v713
        %v875 = vunpack.c.h.b16 %v713
        %v876 = vunpack.c.l.b16 %v714
        %v877 = vunpack.c.h.b16 %v714
        %v878 = vunpack.c.l.b16 %v715
        %v879 = vunpack.c.h.b16 %v715
        %v880 = vunpack.c.l.b16 %v716
        %v881 = vunpack.c.h.b16 %v716
        %v882 = vunpack.c.l.b16 %v717
        %v883 = vunpack.c.h.b16 %v717
        %v884 = vunpack.c.l.b16 %v718
        %v885 = vunpack.c.h.b16 %v718
        %v886 = vunpack.c.l.b16 %v719
        %v887 = vunpack.c.h.b16 %v719
        %v888 = vunpack.c.l.b16 %v720
        %v889 = vunpack.c.h.b16 %v720
        %v890 = vunpack.c.l.b16 %v721
        %v891 = vunpack.c.h.b16 %v721
        %v892 = vunpack.c.l.b16 %v722
        %v893 = vunpack.c.h.b16 %v722
        %v894 = vunpack.c.l.b16 %v723
        %v895 = vunpack.c.h.b16 %v723
        %v896 = vunpack.c.l.b16 %v724
        %v897 = vunpack.c.h.b16 %v724
        %v898 = vunpack.c.l.b16 %v725
        %v899 = vunpack.c.h.b16 %v725
        %v900 = vunpack.c.l.b16 %v726
        %v901 = vunpack.c.h.b16 %v726
        %v902 = vunpack.c.l.b16 %v727
        %v903 = vunpack.c.h.b16 %v727
        %v904 = vunpack.c.l.b16 %v728
        %v905 = vunpack.c.h.b16 %v728
        %v906 = vunpack.c.l.b16 %v729
        %v907 = vunpack.c.h.b16 %v729
        %v908 = vunpack.c.l.b16 %v730
        %v909 = vunpack.c.h.b16 %v730
        %v910 = vunpack.c.l.b16 %v731
        %v911 = vunpack.c.h.b16 %v731
        %v912 = vunpack.c.l.b16 %v732
        %v913 = vunpack.c.h.b16 %v732
        %v914 = vunpack.c.l.b16 %v733
        %v915 = vunpack.c.h.b16 %v733
        %v916 = vunpack.c.l.b16 %v734
        %v917 = vunpack.c.h.b16 %v734
        %v918 = vunpack.c.l.b16 %v735
        %v919 = vunpack.c.h.b16 %v735
        %v920 = vunpack.c.l.b16 %v736
        %v921 = vunpack.c.h.b16 %v736
        %v922 = vunpack.c.l.b16 %v737
        %v923 = vunpack.c.h.b16 %v737
        %v924 = vunpack.c.l.b16 %v738
        %v925 = vunpack.c.h.b16 %v738
        %v926 = vunpack.c.l.b16 %v739
        %v927 = vunpack.c.h.b16 %v739
        %v928 = vunpack.c.l.b16 %v740
        %v929 = vunpack.c.h.b16 %v740
        %v930 = vunpack.c.l.b16 %v741
        %v931 = vunpack.c.h.b16 %v741
        %v932 = vunpack.c.l.b16 %v742
        %v933 = vunpack.c.h.b16 %v742
        %v934 = vunpack.c.l.b16 %v743
        %v935 = vunpack.c.h.b16 %v743
        %v936 = vunpack.c.l.b16 %v744
        %v937 = vunpack.c.h.b16 %v744
        %v938 = vunpack.c.l.b16 %v745
        %v939 = vunpack.c.h.b16 %v745
        %v940 = vunpack.c.l.b16 %v746
        %v941 = vunpack.c.h.b16 %v746
        %v942 = vunpack.c.l.b16 %v747
        %v943 = vunpack.c.h.b16 %v747
        %v944 = vunpack.c.l.b16 %v748
        %v945 = vunpack.c.h.b16 %v748
        %v946 = vunpack.c.l.b16 %v749
        %v947 = vunpack.c.h.b16 %v749
        %v948 = vunpack.c.l.b16 %v750
        %v949 = vunpack.c.h.b16 %v750
        %v950 = vunpack.c.l.b16 %v751
        %v951 = vunpack.c.h.b16 %v751
        %v952 = vunpack.c.l.b16 %v752
        %v953 = vunpack.c.h.b16 %v752
        %v954 = vunpack.c.l.b16 %v753
        %v955 = vunpack.c.h.b16 %v753
        %v956 = vunpack.c.l.b16 %v754
        %v957 = vunpack.c.h.b16 %v754
        %v958 = vunpack.c.l.b16 %v755
        %v959 = vunpack.c.h.b16 %v755
        %v960 = vpack.c.b16 %v834, %v832
        %v961 = vpack.c.b16 %v835, %v833
        %v962 = vpack.c.b16 %v838, %v836
        %v963 = vpack.c.b16 %v839, %v837
        %v964 = vpack.c.b16 %v842, %v840
        %v965 = vpack.c.b16 %v843, %v841
        %v966 = vpack.c.b16 %v846, %v844
        %v967 = vpack.c.b16 %v847, %v845
        %v968 = vpack.c.b16 %v850, %v848
        %v969 = vpack.c.b16 %v851, %v849
        %v970 = vpack.c.b16 %v854, %v852
        %v971 = vpack.c.b16 %v855, %v853
        %v972 = vpack.c.b16 %v858, %v856
        %v973 = vpack.c.b16 %v859, %v857
        %v974 = vpack.c.b16 %v862, %v860
        %v975 = vpack.c.b16 %v863, %v861
        %v976 = vpack.c.b16 %v866, %v864
        %v977 = vpack.c.b16 %v867, %v865
        %v978 = vpack.c.b16 %v870, %v868
        %v979 = vpack.c.b16 %v871, %v869
        %v980 = vpack.c.b16 %v874, %v872
        %v981 = vpack.c.b16 %v875, %v873
        %v982 = vpack.c.b16 %v878, %v876
        %v983 = vpack.c.b16 %v879, %v877
        %v984 = vpack.c.b16 %v882, %v880
        %v985 = vpack.c.b16 %v883, %v881
        %v986 = vpack.c.b16 %v886, %v884
        %v987 = vpack.c.b16 %v887, %v885
        %v988 = vpack.c.b16 %v890, %v888
        %v989 = vpack.c.b16 %v891, %v889
        %v990 = vpack.c.b16 %v894, %v892
        %v991 = vpack.c.b16 %v895, %v893
        %v992 = vpack.c.b16 %v898, %v896
        %v993 = vpack.c.b16 %v899, %v897
        %v994 = vpack.c.b16 %v902, %v900
        %v995 = vpack.c.b16 %v903, %v901
        %v996 = vpack.c.b16 %v906, %v904
        %v997 = vpack.c.b16 %v907, %v905
        %v998 = vpack.c.b16 %v910, %v908
        %v999 = vpack.c.b16 %v911, %v909
        %v1000 = vpack.c.b16 %v914, %v912
        %v1001 = vpack.c.b16 %v915, %v913
        %v1002 = vpack.c.b16 %v918, %v916
        %v1003 = vpack.c.b16 %v919, %v917
        %v1004 = vpack.c.b16 %v922, %v920
        %v1005 = vpack.c.b16 %v923, %v921
        %v1006 = vpack.c.b16 %v926, %v924
        %v1007 = vpack.c.b16 %v927, %v925
        %v1008 = vpack.c.b16 %v930, %v928
        %v1009 = vpack.c.b16 %v931, %v929
        %v1010 = vpack.c.b16 %v934, %v932
        %v1011 = vpack.c.b16 %v935, %v933
        %v1012 = vpack.c.b16 %v938, %v936
        %v1013 = vpack.c.b16 %v939, %v937
        %v1014 = vpack.c.b16 %v942, %v940
        %v1015 = vpack.c.b16 %v943, %v941
        %v1016 = vpack.c.b16 %v946, %v944
        %v1017 = vpack.c.b16 %v947, %v945
        %v1018 = vpack.c.b16 %v950, %v948
        %v1019 = vpack.c.b16 %v951, %v949
        %v1020 = vpack.c.b16 %v954, %v952
        %v1021 = vpack.c.b16 %v955, %v953
        %v1022 = vpack.c.b16 %v958, %v956
        %v1023 = vpack.c.b16 %v959, %v957
        %1088 = vmatprep.subr.bf16.mxu0 %v961
        %1089 = vmatpush1.bf16.msra.mxu0 %v960
        %1090 = vmatprep.subr.bf16.mxu0 %v963
        %1091 = vmatpush1.bf16.msra.mxu0 %v962
        %1092 = vmatprep.subr.bf16.mxu0 %v965
        %1093 = vmatpush1.bf16.msra.mxu0 %v964
        %1094 = vmatprep.subr.bf16.mxu0 %v967
        %1095 = vmatpush1.bf16.msra.mxu0 %v966
        %1096 = vmatprep.subr.bf16.mxu0 %v969
        %1097 = vmatpush1.bf16.msra.mxu0 %v968
        %1098 = vmatprep.subr.bf16.mxu0 %v971
        %1099 = vmatpush1.bf16.msra.mxu0 %v970
        %1100 = vmatprep.subr.bf16.mxu0 %v973
        %1101 = vmatpush1.bf16.msra.mxu0 %v972
        %1102 = vmatprep.subr.bf16.mxu0 %v975
        %1103 = vmatpush1.bf16.msra.mxu0 %v974
        %1104 = vmatprep.subr.bf16.mxu0 %v977
        %1105 = vmatpush1.bf16.msra.mxu0 %v976
        %1106 = vmatprep.subr.bf16.mxu0 %v979
        %1107 = vmatpush1.bf16.msra.mxu0 %v978
        %1108 = vmatprep.subr.bf16.mxu0 %v981
        %1109 = vmatpush1.bf16.msra.mxu0 %v980
        %1110 = vmatprep.subr.bf16.mxu0 %v983
        %1111 = vmatpush1.bf16.msra.mxu0 %v982
        %1112 = vmatprep.subr.bf16.mxu0 %v985
        %1113 = vmatpush1.bf16.msra.mxu0 %v984
        %1114 = vmatprep.subr.bf16.mxu0 %v987
        %1115 = vmatpush1.bf16.msra.mxu0 %v986
        %1116 = vmatprep.subr.bf16.mxu0 %v989
        %1117 = vmatpush1.bf16.msra.mxu0 %v988
        %1118 = vmatprep.subr.bf16.mxu0 %v991
        %1119 = vmatpush1.bf16.msra.mxu0 %v990
        %1120 = vmatprep.mubr.bf16.mxu0 %v685
        %1121 = vmatmul.mubr.bf16.gmra.mrb[0].mxu0 %v684
        %v1122 = vpop.f32.mrb[0].mxu0
        %v1123 = vadd.f32 %v761, %v1122
        %v1124 = vpop.f32.mrb[0].mxu0
        %v1125 = vadd.f32 %v765, %v1124
        %v1126 = vpop.f32.mrb[0].mxu0
        %v1127 = vadd.f32 %v761, %v1126
        %v1128 = vpop.f32.mrb[0].mxu0
        %v1129 = vadd.f32 %v765, %v1128
        %1130 = vmatprep.mubr.bf16.mxu0 %v689
        %1131 = vmatmul.mubr.bf16.gmra.mrb[0].mxu0 %v688
        %v1132 = vpop.f32.mrb[0].mxu0
        %v1133 = vadd.f32 %v761, %v1132
        %v1134 = vpop.f32.mrb[0].mxu0
        %v1135 = vadd.f32 %v765, %v1134
        %v1136 = vpop.f32.mrb[0].mxu0
        %v1137 = vadd.f32 %v761, %v1136
        %v1138 = vpop.f32.mrb[0].mxu0
        %v1139 = vadd.f32 %v765, %v1138
        %1140 = vdwg.mxu0
        %1141 = vmatprep.subr.bf16.mxu0 %v993
        %1142 = vmatpush1.bf16.msra.mxu0 %v992
        %1143 = vmatprep.subr.bf16.mxu0 %v995
        %1144 = vmatpush1.bf16.msra.mxu0 %v994
        %1145 = vmatprep.subr.bf16.mxu0 %v997
        %1146 = vmatpush1.bf16.msra.mxu0 %v996
        %1147 = vmatprep.subr.bf16.mxu0 %v999
        %1148 = vmatpush1.bf16.msra.mxu0 %v998
        %1149 = vmatprep.subr.bf16.mxu0 %v1001
        %1150 = vmatpush1.bf16.msra.mxu0 %v1000
        %1151 = vmatprep.subr.bf16.mxu0 %v1003
        %1152 = vmatpush1.bf16.msra.mxu0 %v1002
        %1153 = vmatprep.subr.bf16.mxu0 %v1005
        %1154 = vmatpush1.bf16.msra.mxu0 %v1004
        %1155 = vmatprep.subr.bf16.mxu0 %v1007
        %1156 = vmatpush1.bf16.msra.mxu0 %v1006
        %1157 = vmatprep.subr.bf16.mxu0 %v1009
        %1158 = vmatpush1.bf16.msra.mxu0 %v1008
        %1159 = vmatprep.subr.bf16.mxu0 %v1011
        %1160 = vmatpush1.bf16.msra.mxu0 %v1010
        %1161 = vmatprep.subr.bf16.mxu0 %v1013
        %1162 = vmatpush1.bf16.msra.mxu0 %v1012
        %1163 = vmatprep.subr.bf16.mxu0 %v1015
        %1164 = vmatpush1.bf16.msra.mxu0 %v1014
        %1165 = vmatprep.subr.bf16.mxu0 %v1017
        %1166 = vmatpush1.bf16.msra.mxu0 %v1016
        %1167 = vmatprep.subr.bf16.mxu0 %v1019
        %1168 = vmatpush1.bf16.msra.mxu0 %v1018
        %1169 = vmatprep.subr.bf16.mxu0 %v1021
        %1170 = vmatpush1.bf16.msra.mxu0 %v1020
        %1171 = vmatprep.subr.bf16.mxu0 %v1023
        %1172 = vmatpush1.bf16.msra.mxu0 %v1022
        %1173 = vmatprep.mubr.bf16.mxu0 %v687
        %1174 = vmatmul.mubr.bf16.gmra.mrb[0].mxu0 %v686
        %v1175 = vpop.f32.mrb[0].mxu0
        %v1176 = vadd.f32 %v1123, %v1175
        %v1177 = vpop.f32.mrb[0].mxu0
        %v1178 = vadd.f32 %v1125, %v1177
        %v1179 = vpop.f32.mrb[0].mxu0
        %v1180 = vadd.f32 %v1127, %v1179
        %v1181 = vpop.f32.mrb[0].mxu0
        %v1182 = vadd.f32 %v1129, %v1181
        %1183 = vmatprep.mubr.bf16.mxu0 %v691
        %1184 = vmatmul.mubr.bf16.gmra.mrb[0].mxu0 %v690
        %v1185 = vpop.f32.mrb[0].mxu0
        %v1186 = vadd.f32 %v1133, %v1185
        %v1187 = vpop.f32.mrb[0].mxu0
        %v1188 = vadd.f32 %v1135, %v1187
        %v1189 = vpop.f32.mrb[0].mxu0
        %v1190 = vadd.f32 %v1137, %v1189
        %v1191 = vpop.f32.mrb[0].mxu0
        %v1192 = vadd.f32 %v1139, %v1191
        %1193 = vdwg.mxu0
        %v1194 = vmax.f32 %v1176, 0.0
        %v1195 = vmax.f32 %v1178, 0.0
        %v1196 = vmax.f32 %v1180, 0.0
        %v1197 = vmax.f32 %v1182, 0.0
        %v1198 = vmax.f32 %v1186, 0.0
        %v1199 = vmax.f32 %v1188, 0.0
        %v1200 = vmax.f32 %v1190, 0.0
        %v1201 = vmax.f32 %v1192, 0.0
        %v1202 = vld [vmem:[%s5] sm:$0x3]
        %v1204 = vlaneseq
        %v1205 = vshrl.u32 %v1204, 7
        %v1206 = vsub.s32 0, %v1205
        %v1207 = vrot.slane %v1202, %v1206
        %v1208 = vlaneseq
        %v1209 = vshrl.u32 %v1208, 7
        %v1210 = vsub.s32 1, %v1209
        %v1211 = vrot.slane %v1202, %v1210
        %v1214 = vmul.f32 %v1194, %v1207
        %v1215 = vmul.f32 %v1195, %v1211
        %v1216 = vmul.f32 %v1196, %v1207
        %v1217 = vmul.f32 %v1197, %v1211
        %v1218 = vmul.f32 %v1198, %v1207
        %v1219 = vmul.f32 %v1199, %v1211
        %v1220 = vmul.f32 %v1200, %v1207
        %v1221 = vmul.f32 %v1201, %v1211
        %v1222 = vadd.f32 %v1214, %v1215
        %1223 = vadd.xlane.f32.xlu0 %v1222
        %v1224 = vpop.xlane.xlu0 %1223
        %v1225 = vadd.f32 %v1216, %v1217
        %1226 = vadd.xlane.f32.xlu0 %v1225
        %v1227 = vpop.xlane.xlu0 %1226
        %v1228 = vadd.f32 %v1218, %v1219
        %1229 = vadd.xlane.f32.xlu0 %v1228
        %v1230 = vpop.xlane.xlu0 %1229
        %v1231 = vadd.f32 %v1220, %v1221
        %1232 = vadd.xlane.f32.xlu0 %v1231
        %v1233 = vpop.xlane.xlu0 %1232
        %s1234 = sld [smem:[#allocation2]]
        %v1235 = vstv %s1234
        %v1236 = vadd.f32 %v1224, %v1235
        %v1237 = vadd.f32 %v1227, %v1235
        %v1238 = vadd.f32 %v1230, %v1235
        %v1239 = vadd.f32 %v1233, %v1235
        %v1240 = vxor.u32 %v1236, 2147483648
        %v1241 = vxor.u32 %v1237, 2147483648
        %v1242 = vxor.u32 %v1238, 2147483648
        %v1243 = vxor.u32 %v1239, 2147483648
        %v1244 = vmul.f32 %v1240, 1.442695
        %v1245 = vpow.pop %v1244
        %v1246 = vmul.f32 %v1241, 1.442695
        %v1247 = vpow.pop %v1246
        %v1248 = vmul.f32 %v1242, 1.442695
        %v1249 = vpow.pop %v1248
        %v1250 = vmul.f32 %v1243, 1.442695
        %v1251 = vpow.pop %v1250
        %v1252 = vadd.f32 %v1245, 1.0
        %v1253 = vadd.f32 %v1247, 1.0
        %v1254 = vadd.f32 %v1249, 1.0
        %v1255 = vadd.f32 %v1251, 1.0
        %v1256 = vrcp.pop %v1252
        %v1257 = vmul.f32 1.0, %v1256
        %v1258 = vrcp.pop %v1253
        %v1259 = vmul.f32 1.0, %v1258
        %v1260 = vrcp.pop %v1254
        %v1261 = vmul.f32 1.0, %v1260
        %v1262 = vrcp.pop %v1255
        %v1263 = vmul.f32 1.0, %v1262
        %vm1264 = vcmask 7168
        %1265 = vst.msk [vmem:[%s329] sm:$0xff] %vm1264, %v1257
        %1266 = vst.msk [vmem:[%s329 + $0x8] sm:$0xff] %vm1264, %v1259
        %1267 = vst.msk [vmem:[%s329 + $0x10] sm:$0xff] %vm1264, %v1261
        %1268 = vst.msk [vmem:[%s329 + $0x18] sm:$0xff] %vm1264, %v1263
        %s1269 = smul.u32 4, %s23
        %p1270 = scmp.lt.s32.totalorder %s1269, 7
        %s1271 = scalar_select %p1270, %s1269, 7
        %s1272 = smul.addr %s1271, 8
        %s1273 = scalar_lea.vmem %s7, %s1272
        // Predicated region
        $region61: #{tpu_custom_call.1} parent=47 // pred_check
          %p1274 = pneg %p193
        $region62: #{tpu_custom_call.1} parent=47 // pred_check_branch
          %1276 = sbr.rel (%p1274) target = $region64
        $region63: #{tpu_custom_call.1} parent=47 // pred_region
          %s1277 = smul.u32 4, %s23
        $region64: #{tpu_custom_call.1} parent=47 // pred_fallthru
          _
      $region48: #{tpu_custom_call.1} parent=5 // pred_fallthru
        _
      %p1278 = scmp.le.s32.totalorder 2, %s18
      // Predicated region
      $region65: #{tpu_custom_call.1} parent=5 // pred_check
        %p1279 = pneg %p1278
      $region66: #{tpu_custom_call.1} parent=5 // pred_check_branch
        %1281 = sbr.rel (%p1279) target = $region68
      $region67: #{tpu_custom_call.1} parent=5 // pred_region
        %s1282 = ssub.s32 %s18, 2
        // Predicated region
        $region69: #{tpu_custom_call.1} parent=67 // pred_check
          %p1283 = pneg %p199
        $region70: #{tpu_custom_call.1} parent=67 // pred_check_branch
          %1285 = sbr.rel (%p1283) target = $region72
        $region71: #{tpu_custom_call.1} parent=67 // pred_region
          %s1286 = smul.u32 4, %s24
          %p1287 = scmp.lt.s32.totalorder %s1286, 7
          %s1288 = scalar_select %p1287, %s1286, 7
          %s1289 = smul.addr %s1288, 8
          %s1290 = scalar_lea.vmem %s7, %s1289
        $region72: #{tpu_custom_call.1} parent=67 // pred_fallthru
          _
      $region68: #{tpu_custom_call.1} parent=5 // pred_fallthru
        _
    $region6: #{tpu_custom_call.1} parent=1 // loop_footer
      %s22 = sadd.s32 1, %s18
    $region7: #{tpu_custom_call.1} parent=1 // loop_footer_branch
      %17 = sbr.rel target = $region3
    $region8: #{tpu_custom_call.1} parent=1 // loop_exit
      _
    %1291 = vsyncpa [#allocation4], 1
    %s1292 = scalar_lea.sflag [#allocation4], 1
    %1293 = vsyncpa %s1292, 1
    %1294 = vsyncpa [#allocation6], 1

</llo_original>
